<compile_context>
chip_gen: v7x
topology: tpu7x:2x2x1
jax: 0.10.0
libtpu: 0.0.40
codegen_flags: <defaults>
</compile_context>

<pallas_src>
import jax
import jax.numpy as jnp
from jax.experimental import pallas as pl
from jax.experimental.pallas import tpu as pltpu

C = 32           # channels (fixed by the module)
K = 5            # conv kernel size
PAD = 2          # 'same' padding for kernel 5, stride 1
POOL_K = 5       # MaxPool1d kernel
POOL_S = 2       # MaxPool1d stride
LANES = 4        # batch elements packed along the lane axis (4 * 32 = 128)
CP = LANES * C   # packed channel width (128)


def resblock_kernel(x_ref, w1_ref, b1_ref, w2_ref, b2_ref, out_ref, scr):
    # x_ref:  (b_grp, L, CP) f32   4 batch elements packed on lanes per group
    # w*_ref: (K*CP, CP)     bf16  tap-major block-diagonal packed conv weights
    # b*_ref: (1, CP)        f32
    # out_ref:(b_grp, Lp, CP) f32
    # scr:    VMEM (L+2*PAD, CP) f32  shared 'same'-halo + pool staging buffer
    n_grp, L, cp = x_ref.shape
    Lp = out_ref.shape[1]

    b1 = b1_ref[...]                              # (1, CP), hoisted
    b2 = b2_ref[...]

    # Zero the conv halo rows once; they stay zero for every group / conv.
    scr[pl.ds(0, PAD), :] = jnp.zeros((PAD, cp), jnp.float32)
    scr[pl.ds(PAD + L, PAD), :] = jnp.zeros((PAD, cp), jnp.float32)

    def im2col_bf16():
        # (L, K*CP) window over the padded scratch rows, bf16 for the MXU.
        return jnp.concatenate(
            [scr[pl.ds(k, L), :] for k in range(K)], axis=1
        ).astype(jnp.bfloat16)

    def body(g, carry):
        x = x_ref[g]                                            # (L, CP) f32

        # ---- conv1: one (L, 640) @ (640, 128) MXU contraction ----
        scr[pl.ds(PAD, L), :] = x
        y1 = jnp.dot(im2col_bf16(), w1_ref[...],
                     preferred_element_type=jnp.float32)
        y1 = jnp.maximum(y1 + b1, 0.0)

        # ---- conv2 (halo rows still zero) ----
        scr[pl.ds(PAD, L), :] = y1
        y2 = jnp.dot(im2col_bf16(), w2_ref[...],
                     preferred_element_type=jnp.float32)

        # ---- bias + residual add + ReLU (f32) ----
        y = jnp.maximum(y2 + b2 + x, 0.0)                       # (L, CP)

        # ---- MaxPool1d(5, stride=2), VALID: 5 strided reads + max ----
        scr[pl.ds(PAD, L), :] = y
        m = scr[pl.ds(PAD, Lp, stride=POOL_S), :]
        for i in range(1, POOL_K):
            m = jnp.maximum(m, scr[pl.ds(PAD + i, Lp, stride=POOL_S), :])
        out_ref[g] = m.astype(out_ref.dtype)
        return carry

    jax.lax.fori_loop(0, n_grp, body, 0, unroll=(n_grp <= 2))


def _pack_weight(w):
    """(Cout, Cin, K) PyTorch conv weight -> tap-major block-diag (K*CP, CP) bf16."""
    wk = jnp.transpose(w, (2, 1, 0)).astype(jnp.float32)         # (K, Cin, Cout)
    eye = jnp.eye(LANES, dtype=jnp.float32)
    big = jnp.einsum('pq,kio->kpiqo', eye, wk)                   # (K,P,Ci,P,Co)
    return big.reshape(K * CP, CP).astype(jnp.bfloat16)


@jax.jit
def resblock_forward(x_ncl, w1, b1, w2, b2):
    """x_ncl: (N, 32, L) float32 (PyTorch NCL). Returns (N, 32, Lp)."""
    N, c_in, L = x_ncl.shape
    assert c_in == C and L >= POOL_K
    Lp = (L - POOL_K) // POOL_S + 1

    # --- pack 4 batch elements along the lane axis: (G, L, 128) ---
    n_pad = ((N + LANES - 1) // LANES) * LANES
    G = n_pad // LANES
    x = x_ncl.astype(jnp.float32)
    if n_pad != N:
        x = jnp.pad(x, ((0, n_pad - N), (0, 0), (0, 0)))
    xp = x.reshape(G, LANES, C, L).transpose(0, 3, 1, 2).reshape(G, L, CP)

    w1p, w2p = _pack_weight(w1), _pack_weight(w2)
    b1p = jnp.tile(b1.astype(jnp.float32), LANES).reshape(1, CP)
    b2p = jnp.tile(b2.astype(jnp.float32), LANES).reshape(1, CP)

    # groups per grid step: ~2 MiB input blocks to amortize the ~0.35us/step
    # overhead, but keep >= 2 grid steps when G allows (v7x has 2 TensorCores).
    bytes_per_group = L * CP * 4
    b_grp = max(1, min(G, (2 << 20) // bytes_per_group))
    if G >= 2:
        b_grp = min(b_grp, (G + 1) // 2)
    while G % b_grp:
        b_grp -= 1

    # VMEM budget from actual block sizes (double-buffered in/out + weights
    # + scratch), with headroom; stays within v7x's 64 MiB physical VMEM.
    in_block = b_grp * L * CP * 4
    out_block = b_grp * Lp * CP * 4
    w_bytes = 2 * (K * CP * CP * 2) + 2 * (CP * 4)
    scr_bytes = (L + 2 * PAD + 8) * CP * 4
    vmem_needed = 2 * (in_block + out_block) + w_bytes + scr_bytes
    vmem_limit = int(min(max(2 * vmem_needed, 32 << 20), 64 << 20))

    out = pl.pallas_call(
        resblock_kernel,
        out_shape=jax.ShapeDtypeStruct((G, Lp, CP), jnp.float32),
        grid_spec=pltpu.PrefetchScalarGridSpec(
            num_scalar_prefetch=0,
            grid=(G // b_grp,),
            in_specs=[
                pl.BlockSpec((b_grp, L, CP), lambda n: (n, 0, 0)),
                pl.BlockSpec((K * CP, CP), lambda n: (0, 0)),
                pl.BlockSpec((1, CP), lambda n: (0, 0)),
                pl.BlockSpec((K * CP, CP), lambda n: (0, 0)),
                pl.BlockSpec((1, CP), lambda n: (0, 0)),
            ],
            out_specs=pl.BlockSpec((b_grp, Lp, CP), lambda n: (n, 0, 0)),
            scratch_shapes=[pltpu.VMEM((L + 2 * PAD, CP), jnp.float32)],
        ),
        compiler_params=pltpu.CompilerParams(
            dimension_semantics=("parallel",),
            vmem_limit_bytes=vmem_limit),
    )(xp, w1p, b1p, w2p, b2p)

    # --- unpack lanes back to PyTorch NCL: (N, 32, Lp) ---
    out = out.reshape(G, Lp, LANES, C).transpose(0, 2, 3, 1).reshape(n_pad, C, Lp)
    return out[:N]


def ref_forward(x, w1, b1, w2, b2):
    """Pure-JAX (f32) reference matching the PyTorch forward."""
    def conv(a, w, b):
        y = jax.lax.conv_general_dilated(
            a, w, window_strides=(1,), padding="SAME",
            dimension_numbers=("NCH", "OIH", "NCH"))
        return y + b[None, :, None]

    y = jax.nn.relu(conv(x, w1, b1))
    y = conv(y, w2, b2) + x
    y = jax.nn.relu(y)
    return jax.lax.reduce_window(y, -jnp.inf, jax.lax.max,
                                 (1, 1, POOL_K), (1, 1, POOL_S), "VALID")


if __name__ == "__main__":
    key = jax.random.PRNGKey(0)
    k_x, k_w1, k_w2, k_b1, k_b2 = jax.random.split(key, 5)

    N, L = 2, 16                                     # small synthetic shapes
    x = jax.random.normal(k_x, (N, C, L), dtype=jnp.float32)

    # Xavier-uniform conv weights (as in __init__); small nonzero biases to
    # exercise the bias path.
    fan = C * K
    bound = (6.0 / (fan + fan)) ** 0.5
    w1 = jax.random.uniform(k_w1, (C, C, K), jnp.float32, -bound, bound)
    w2 = jax.random.uniform(k_w2, (C, C, K), jnp.float32, -bound, bound)
    b1 = 0.1 * jax.random.normal(k_b1, (C,), jnp.float32)
    b2 = 0.1 * jax.random.normal(k_b2, (C,), jnp.float32)

    out = jax.block_until_ready(resblock_forward(x, w1, b1, w2, b2))
    expected = ref_forward(x, w1, b1, w2, b2)

    assert out.shape == expected.shape, (out.shape, expected.shape)
    # bf16 MXU operands (f32 accumulation) vs the f32 reference -> loosened tol.
    assert jnp.allclose(out, expected, atol=5e-2, rtol=5e-2), "mismatch vs reference"

    print("KERNEL_OK")
</pallas_src>

<mosaic_0001>
module attributes {stable_mosaic.version = 11 : i64} {
  func.func @resblock_kernel(%arg0: i32, %arg1: memref<1x16x128xf32, #tpu.memory_space<vmem>>, %arg2: memref<640x128xbf16, #tpu.memory_space<vmem>>, %arg3: memref<1x128xf32, #tpu.memory_space<vmem>>, %arg4: memref<640x128xbf16, #tpu.memory_space<vmem>>, %arg5: memref<1x128xf32, #tpu.memory_space<vmem>>, %arg6: memref<1x6x128xf32, #tpu.memory_space<vmem>>, %arg7: memref<20x128xf32, #tpu.memory_space<vmem>>) attributes {dimension_semantics = [#tpu.dimension_semantics<parallel>], iteration_bounds = array<i64: 1>, scalar_prefetch = 0 : i64, scratch_operands = 1 : i64, tpu.core_type = #tpu.core_type<tc>, window_params = [{transform_indices = @transform_0, window_bounds = array<i64: 1, 16, 128>}, {pipeline_mode = #tpu.pipeline_mode<synchronous>, transform_indices = @transform_1, window_bounds = array<i64: 640, 128>}, {pipeline_mode = #tpu.pipeline_mode<synchronous>, transform_indices = @transform_2, window_bounds = array<i64: 1, 128>}, {pipeline_mode = #tpu.pipeline_mode<synchronous>, transform_indices = @transform_3, window_bounds = array<i64: 640, 128>}, {pipeline_mode = #tpu.pipeline_mode<synchronous>, transform_indices = @transform_4, window_bounds = array<i64: 1, 128>}, {transform_indices = @transform_5, window_bounds = array<i64: 1, 6, 128>}]} {
    %c0 = arith.constant 0 : index
    %c0_0 = arith.constant 0 : index
    %0 = vector.load %arg3[%c0, %c0_0] : memref<1x128xf32, #tpu.memory_space<vmem>>, vector<1x128xf32>
    %c0_1 = arith.constant 0 : index
    %c0_2 = arith.constant 0 : index
    %1 = vector.load %arg5[%c0_1, %c0_2] : memref<1x128xf32, #tpu.memory_space<vmem>>, vector<1x128xf32>
    %cst = arith.constant 0.000000e+00 : f32
    %2 = vector.broadcast %cst : f32 to vector<2x128xf32>
    %c0_3 = arith.constant 0 : index
    %c0_4 = arith.constant 0 : index
    %3 = vector.load %arg7[%c0_3, %c0_4] : memref<20x128xf32, #tpu.memory_space<vmem>>, vector<2x128xf32>
    tpu.vector_store %arg7[%c0_3, %c0_4], %2 {strides = array<i32>} : memref<20x128xf32, #tpu.memory_space<vmem>>, vector<2x128xf32>,
    %cst_5 = arith.constant 0.000000e+00 : f32
    %4 = vector.broadcast %cst_5 : f32 to vector<2x128xf32>
    %c18 = arith.constant 18 : index
    %c0_6 = arith.constant 0 : index
    %5 = vector.load %arg7[%c18, %c0_6] : memref<20x128xf32, #tpu.memory_space<vmem>>, vector<2x128xf32>
    tpu.vector_store %arg7[%c18, %c0_6], %4 {strides = array<i32>} : memref<20x128xf32, #tpu.memory_space<vmem>>, vector<2x128xf32>,
    %c0_i32 = arith.constant 0 : i32
    %6 = arith.index_cast %c0_i32 : i32 to index
    %c0_7 = arith.constant 0 : index
    %c0_8 = arith.constant 0 : index
    %7 = vector.load %arg1[%6, %c0_7, %c0_8] : memref<1x16x128xf32, #tpu.memory_space<vmem>>, vector<1x16x128xf32>
    %8 = vector.shape_cast %7 : vector<1x16x128xf32> to vector<16x128xf32>
    %c2 = arith.constant 2 : index
    %c0_9 = arith.constant 0 : index
    %9 = vector.load %arg7[%c2, %c0_9] : memref<20x128xf32, #tpu.memory_space<vmem>>, vector<16x128xf32>
    tpu.vector_store %arg7[%c2, %c0_9], %8 {strides = array<i32>} : memref<20x128xf32, #tpu.memory_space<vmem>>, vector<16x128xf32>,
    %c0_10 = arith.constant 0 : index
    %c0_11 = arith.constant 0 : index
    %10 = vector.load %arg7[%c0_10, %c0_11] : memref<20x128xf32, #tpu.memory_space<vmem>>, vector<16x128xf32>
    %c1 = arith.constant 1 : index
    %c0_12 = arith.constant 0 : index
    %11 = vector.load %arg7[%c1, %c0_12] : memref<20x128xf32, #tpu.memory_space<vmem>>, vector<16x128xf32>
    %c2_13 = arith.constant 2 : index
    %c0_14 = arith.constant 0 : index
    %12 = vector.load %arg7[%c2_13, %c0_14] : memref<20x128xf32, #tpu.memory_space<vmem>>, vector<16x128xf32>
    %c3 = arith.constant 3 : index
    %c0_15 = arith.constant 0 : index
    %13 = vector.load %arg7[%c3, %c0_15] : memref<20x128xf32, #tpu.memory_space<vmem>>, vector<16x128xf32>
    %c4 = arith.constant 4 : index
    %c0_16 = arith.constant 0 : index
    %14 = vector.load %arg7[%c4, %c0_16] : memref<20x128xf32, #tpu.memory_space<vmem>>, vector<16x128xf32>
    %15 = tpu.concatenate %10, %11, %12, %13, %14 in 1 : vector<16x128xf32>, vector<16x128xf32>, vector<16x128xf32>, vector<16x128xf32>, vector<16x128xf32> -> vector<16x640xf32>
    %16 = arith.truncf %15 : vector<16x640xf32> to vector<16x640xbf16>
    %c0_17 = arith.constant 0 : index
    %c0_18 = arith.constant 0 : index
    %17 = vector.load %arg2[%c0_17, %c0_18] : memref<640x128xbf16, #tpu.memory_space<vmem>>, vector<640x128xbf16>
    %cst_19 = arith.constant dense<0.000000e+00> : vector<16x128xf32>
    %18 = tpu.matmul %16, %17, %cst_19 {dimension_numbers = #tpu.dot_dimension_numbers<[1], [0], [0], [1], [0, 0, 1, 1], [], []>} : vector<16x640xbf16>, vector<640x128xbf16>, vector<16x128xf32> -> vector<16x128xf32>
    %19 = vector.broadcast %0 : vector<1x128xf32> to vector<16x128xf32>
    %20 = arith.addf %18, %19 : vector<16x128xf32>
    %cst_20 = arith.constant 0.000000e+00 : f32
    %21 = vector.broadcast %cst_20 : f32 to vector<16x128xf32>
    %22 = arith.maximumf %20, %21 : vector<16x128xf32>
    %c2_21 = arith.constant 2 : index
    %c0_22 = arith.constant 0 : index
    %23 = vector.load %arg7[%c2_21, %c0_22] : memref<20x128xf32, #tpu.memory_space<vmem>>, vector<16x128xf32>
    tpu.vector_store %arg7[%c2_21, %c0_22], %22 {strides = array<i32>} : memref<20x128xf32, #tpu.memory_space<vmem>>, vector<16x128xf32>,
    %c0_23 = arith.constant 0 : index
    %c0_24 = arith.constant 0 : index
    %24 = vector.load %arg7[%c0_23, %c0_24] : memref<20x128xf32, #tpu.memory_space<vmem>>, vector<16x128xf32>
    %c1_25 = arith.constant 1 : index
    %c0_26 = arith.constant 0 : index
    %25 = vector.load %arg7[%c1_25, %c0_26] : memref<20x128xf32, #tpu.memory_space<vmem>>, vector<16x128xf32>
    %c2_27 = arith.constant 2 : index
    %c0_28 = arith.constant 0 : index
    %26 = vector.load %arg7[%c2_27, %c0_28] : memref<20x128xf32, #tpu.memory_space<vmem>>, vector<16x128xf32>
    %c3_29 = arith.constant 3 : index
    %c0_30 = arith.constant 0 : index
    %27 = vector.load %arg7[%c3_29, %c0_30] : memref<20x128xf32, #tpu.memory_space<vmem>>, vector<16x128xf32>
    %c4_31 = arith.constant 4 : index
    %c0_32 = arith.constant 0 : index
    %28 = vector.load %arg7[%c4_31, %c0_32] : memref<20x128xf32, #tpu.memory_space<vmem>>, vector<16x128xf32>
    %29 = tpu.concatenate %24, %25, %26, %27, %28 in 1 : vector<16x128xf32>, vector<16x128xf32>, vector<16x128xf32>, vector<16x128xf32>, vector<16x128xf32> -> vector<16x640xf32>
    %30 = arith.truncf %29 : vector<16x640xf32> to vector<16x640xbf16>
    %c0_33 = arith.constant 0 : index
    %c0_34 = arith.constant 0 : index
    %31 = vector.load %arg4[%c0_33, %c0_34] : memref<640x128xbf16, #tpu.memory_space<vmem>>, vector<640x128xbf16>
    %cst_35 = arith.constant dense<0.000000e+00> : vector<16x128xf32>
    %32 = tpu.matmul %30, %31, %cst_35 {dimension_numbers = #tpu.dot_dimension_numbers<[1], [0], [0], [1], [0, 0, 1, 1], [], []>} : vector<16x640xbf16>, vector<640x128xbf16>, vector<16x128xf32> -> vector<16x128xf32>
    %33 = vector.broadcast %1 : vector<1x128xf32> to vector<16x128xf32>
    %34 = arith.addf %32, %33 : vector<16x128xf32>
    %35 = arith.addf %34, %8 : vector<16x128xf32>
    %cst_36 = arith.constant 0.000000e+00 : f32
    %36 = vector.broadcast %cst_36 : f32 to vector<16x128xf32>
    %37 = arith.maximumf %35, %36 : vector<16x128xf32>
    %c2_37 = arith.constant 2 : index
    %c0_38 = arith.constant 0 : index
    %38 = vector.load %arg7[%c2_37, %c0_38] : memref<20x128xf32, #tpu.memory_space<vmem>>, vector<16x128xf32>
    tpu.vector_store %arg7[%c2_37, %c0_38], %37 {strides = array<i32>} : memref<20x128xf32, #tpu.memory_space<vmem>>, vector<16x128xf32>,
    %c2_39 = arith.constant 2 : index
    %c0_40 = arith.constant 0 : index
    %39 = tpu.strided_load %arg7[%c2_39, %c0_40] {strides = array<i32: 2, 1>} : memref<20x128xf32, #tpu.memory_space<vmem>>, vector<6x128xf32>
    %c3_41 = arith.constant 3 : index
    %c0_42 = arith.constant 0 : index
    %40 = tpu.strided_load %arg7[%c3_41, %c0_42] {strides = array<i32: 2, 1>} : memref<20x128xf32, #tpu.memory_space<vmem>>, vector<6x128xf32>
    %41 = arith.maximumf %39, %40 : vector<6x128xf32>
    %c4_43 = arith.constant 4 : index
    %c0_44 = arith.constant 0 : index
    %42 = tpu.strided_load %arg7[%c4_43, %c0_44] {strides = array<i32: 2, 1>} : memref<20x128xf32, #tpu.memory_space<vmem>>, vector<6x128xf32>
    %43 = arith.maximumf %41, %42 : vector<6x128xf32>
    %c5 = arith.constant 5 : index
    %c0_45 = arith.constant 0 : index
    %44 = tpu.strided_load %arg7[%c5, %c0_45] {strides = array<i32: 2, 1>} : memref<20x128xf32, #tpu.memory_space<vmem>>, vector<6x128xf32>
    %45 = arith.maximumf %43, %44 : vector<6x128xf32>
    %c6 = arith.constant 6 : index
    %c0_46 = arith.constant 0 : index
    %46 = tpu.strided_load %arg7[%c6, %c0_46] {strides = array<i32: 2, 1>} : memref<20x128xf32, #tpu.memory_space<vmem>>, vector<6x128xf32>
    %47 = arith.maximumf %45, %46 : vector<6x128xf32>
    %48 = arith.index_cast %c0_i32 : i32 to index
    %c0_47 = arith.constant 0 : index
    %c0_48 = arith.constant 0 : index
    %49 = vector.load %arg6[%48, %c0_47, %c0_48] : memref<1x6x128xf32, #tpu.memory_space<vmem>>, vector<1x6x128xf32>
    %50 = vector.shape_cast %49 : vector<1x6x128xf32> to vector<6x128xf32>
    %51 = vector.shape_cast %47 : vector<6x128xf32> to vector<1x6x128xf32>
    tpu.vector_store %arg6[%48, %c0_47, %c0_48], %51 {strides = array<i32>} : memref<1x6x128xf32, #tpu.memory_space<vmem>>, vector<1x6x128xf32>,
    %c1_i32 = arith.constant 1 : i32
    return
  }
  func.func @transform_0(%arg0: i32) -> (i32, i32, i32) {
    %c0_i32 = arith.constant 0 : i32
    %c0_i32_0 = arith.constant 0 : i32
    %c0_i32_1 = arith.constant 0 : i32
    return %arg0, %c0_i32, %c0_i32_0 : i32, i32, i32
  }
  func.func @transform_1(%arg0: i32) -> (i32, i32) {
    %c0_i32 = arith.constant 0 : i32
    %c0_i32_0 = arith.constant 0 : i32
    %c0_i32_1 = arith.constant 0 : i32
    return %c0_i32, %c0_i32_0 : i32, i32
  }
  func.func @transform_2(%arg0: i32) -> (i32, i32) {
    %c0_i32 = arith.constant 0 : i32
    %c0_i32_0 = arith.constant 0 : i32
    %c0_i32_1 = arith.constant 0 : i32
    return %c0_i32, %c0_i32_0 : i32, i32
  }
  func.func @transform_3(%arg0: i32) -> (i32, i32) {
    %c0_i32 = arith.constant 0 : i32
    %c0_i32_0 = arith.constant 0 : i32
    %c0_i32_1 = arith.constant 0 : i32
    return %c0_i32, %c0_i32_0 : i32, i32
  }
  func.func @transform_4(%arg0: i32) -> (i32, i32) {
    %c0_i32 = arith.constant 0 : i32
    %c0_i32_0 = arith.constant 0 : i32
    %c0_i32_1 = arith.constant 0 : i32
    return %c0_i32, %c0_i32_0 : i32, i32
  }
  func.func @transform_5(%arg0: i32) -> (i32, i32, i32) {
    %c0_i32 = arith.constant 0 : i32
    %c0_i32_0 = arith.constant 0 : i32
    %c0_i32_1 = arith.constant 0 : i32
    return %arg0, %c0_i32, %c0_i32_0 : i32, i32, i32
  }
}

</mosaic_0001>

<llo_original>
// kernel: tile.13
$region0: #{tile.13}
  #allocation0 [shape = 's32[1]{0}', space=sflag, size = 0x4, scoped, tag = 'scoped memory for tile.13']
  %s0 = inlined_call_operand.vmem [shape: f32[32], index: 0, kind: input, shape index: {}]
  %s1 = inlined_call_operand.vmem [shape: f32[4,32], index: 1, kind: output, shape index: {}]
  // Predicated region
  $region2: #{tile.13} parent=0 // pred_check
    _
  $region3: #{tile.13} parent=0 // pred_check_branch
    %3 = sbr.rel (0) target = $region5
  $region4: #{tile.13} parent=0 // pred_region
    _
  $region5: #{tile.13} parent=0 // pred_fallthru
    _
  %v4 = vld [vmem:[%s0] ss:$0 sm:$0xff]
  %5 = vst [vmem:[%s1] sm:$0xf] %v4

// kernel: tile.14
$region0: #{tile.14}
  %s0 = inlined_call_operand.vmem [shape: f32[4,32], index: 0, kind: input, shape index: {}]
  %s1 = inlined_call_operand.vmem [shape: f32[1,128], index: 1, kind: output, shape index: {}]
  $region1: #{tile.14} parent=0
    #allocation0 [shape = 'u8[4096]{0}', space=vmem, size = 0x1000, scoped, tag = 'scoped mem for output reshape']
    #allocation1 [shape = 'u8[4096]{0}', space=vmem, size = 0x1000, scoped, tag = 'scoped mem for input reshape']
    %s3 = sshllo.u32 0, 4
    %v4 = vld [vmem:[%s0] sm:%s3]
    %5 = vst [vmem:[#allocation1] sm:%s3] %v4
    %v6 = vld [vmem:[#allocation1] sm:$0x1]
    %vm7 = vcmask 261120
    %8 = vst.msk [vmem:[#allocation0] sm:$0x1] %vm7, %v6
    %s9 = scalar_lea.vmem [#allocation1], 3
    %v10 = vld [vmem:[%s9] sm:$0x1]
    %11 = vrot.lane.b32.xlu0 %v10, 96
    %v12 = vpop.permute.xlu0 %11
    %vm13 = vcmask 1048320
    %14 = vst.msk [vmem:[#allocation0] sm:$0x1] %vm13, %v12
    %s15 = scalar_lea.vmem [#allocation1], 2
    %v16 = vld [vmem:[%s15] sm:$0x1]
    %17 = vrot.lane.b32.xlu0 %v16, 64
    %v18 = vpop.permute.xlu0 %17
    %vm19 = vcmask 785920
    %20 = vst.msk [vmem:[#allocation0] sm:$0x1] %vm19, %v18
    %s21 = scalar_lea.vmem [#allocation1], 1
    %v22 = vld [vmem:[%s21] sm:$0x1]
    %23 = vrot.lane.b32.xlu0 %v22, 32
    %v24 = vpop.permute.xlu0 %23
    %vm25 = vcmask 523520
    %26 = vst.msk [vmem:[#allocation0] sm:$0x1] %vm25, %v24
    %s28 = sshllo.u32 0, 1
    %v30 = vld [vmem:[#allocation0] sm:%s28]
    %s31 = sshllo.u32 0, 1
    %32 = vst [vmem:[%s1] sm:%s31] %v30

// kernel: resblock_forward.1
$region0: #{resblock_forward.1}
  #allocation0 [shape = 'u32[]', space=smem, size = 0x4, offset = 0x4, fixed_abs, tag = 'smem constant byte address 0x4 - core index']
  #allocation1 [shape = 'u32[144,128]{1,0:T(1,128)}', space=vmem, size = 0x12000, scoped, tag = 'internal scratch']
  #allocation2 [shape = 'f32[20,128]{1,0:T(8,128)}', space=vmem, size = 0x3000, scoped, tag = 'scratch operand']
  %s0 = inlined_call_operand.vmem [shape: f32[1,16,128], index: 0, kind: input, shape index: {}]
  %s1 = inlined_call_operand.vmem [shape: bf16[640,128], index: 1, kind: input, shape index: {}]
  %s2 = inlined_call_operand.vmem [shape: f32[1,128], index: 2, kind: input, shape index: {}]
  %s3 = inlined_call_operand.vmem [shape: bf16[640,128], index: 3, kind: input, shape index: {}]
  %s4 = inlined_call_operand.vmem [shape: f32[1,128], index: 4, kind: input, shape index: {}]
  %s5 = inlined_call_operand.vmem [shape: f32[1,6,128], index: 5, kind: output, shape index: {}]
  %s6 = sld [smem:[#allocation0]]
  $region30: #{resblock_forward.1} parent=0
    _
  %s8 = ssub.s32 1, %s6
  %s9 = scalar_select 0, %s8, %s6
  // Predicated region
  $region2: #{resblock_forward.1} parent=0 // pred_check
    _
  $region3: #{resblock_forward.1} parent=0 // pred_check_branch
    %11 = sbr.rel (0) target = $region5
  $region4: #{resblock_forward.1} parent=0 // pred_region
    _
  $region5: #{resblock_forward.1} parent=0 // pred_fallthru
    _
  // Predicated region
  $region6: #{resblock_forward.1} parent=0 // pred_check
    _
  $region7: #{resblock_forward.1} parent=0 // pred_check_branch
    %13 = sbr.rel (0) target = $region9
  $region8: #{resblock_forward.1} parent=0 // pred_region
    _
  $region9: #{resblock_forward.1} parent=0 // pred_fallthru
    _
  // Predicated region
  $region10: #{resblock_forward.1} parent=0 // pred_check
    _
  $region11: #{resblock_forward.1} parent=0 // pred_check_branch
    %15 = sbr.rel (0) target = $region13
  $region12: #{resblock_forward.1} parent=0 // pred_region
    _
  $region13: #{resblock_forward.1} parent=0 // pred_fallthru
    _
  // Predicated region
  $region14: #{resblock_forward.1} parent=0 // pred_check
    _
  $region15: #{resblock_forward.1} parent=0 // pred_check_branch
    %17 = sbr.rel (0) target = $region17
  $region16: #{resblock_forward.1} parent=0 // pred_region
    _
  $region17: #{resblock_forward.1} parent=0 // pred_fallthru
    _
  // Predicated region
  $region18: #{resblock_forward.1} parent=0 // pred_check
    _
  $region19: #{resblock_forward.1} parent=0 // pred_check_branch
    %19 = sbr.rel (0) target = $region21
  $region20: #{resblock_forward.1} parent=0 // pred_region
    _
  $region21: #{resblock_forward.1} parent=0 // pred_fallthru
    _
  %v21 = vld [vmem:[%s2] sm:$0x1]
  %v22 = vld [vmem:[%s4] sm:$0x1]
  %23 = vst [vmem:[#allocation2] sm:$0x3] 0.0
  %24 = vst [vmem:[#allocation2 + $0x12] sm:$0x3] 0.0
  %v25 = vld [vmem:[%s0] sm:$0xff]
  %v26 = vld [vmem:[%s0 + $0x8] sm:$0xff]
  %27 = vst [vmem:[#allocation2 + $0x2] sm:$0xff] %v25
  %28 = vst [vmem:[#allocation2 + $0xa] sm:$0xff] %v26
  %v29 = vld [vmem:[#allocation2] sm:$0xff]
  %v30 = vld [vmem:[#allocation2 + $0x8] sm:$0xff]
  %v31 = vld [vmem:[#allocation2 + $0x1] sm:$0xff]
  %v32 = vld [vmem:[#allocation2 + $0x9] sm:$0xff]
  %v33 = vld [vmem:[#allocation2 + $0x2] sm:$0xff]
  %v34 = vld [vmem:[#allocation2 + $0xa] sm:$0xff]
  %v35 = vld [vmem:[#allocation2 + $0x3] sm:$0xff]
  %v36 = vld [vmem:[#allocation2 + $0xb] sm:$0xff]
  %v37 = vld [vmem:[#allocation2 + $0x4] sm:$0xff]
  %v38 = vld [vmem:[#allocation2 + $0xc] sm:$0xff]
  %v39 = vpack.c.bf16 %v30, %v29
  %v40 = vpack.c.bf16 %v32, %v31
  %v41 = vpack.c.bf16 %v34, %v33
  %v42 = vpack.c.bf16 %v36, %v35
  %v43 = vpack.c.bf16 %v38, %v37
  %v44 = vld [vmem:[%s1] sm:$0xf]
  %v45 = vld [vmem:[%s1 + $0x4] sm:$0xf]
  %v46 = vld [vmem:[%s1 + $0x8] sm:$0xf]
  %v47 = vld [vmem:[%s1 + $0xc] sm:$0xf]
  %v48 = vld [vmem:[%s1 + $0x10] sm:$0xf]
  %v49 = vld [vmem:[%s1 + $0x14] sm:$0xf]
  %v50 = vld [vmem:[%s1 + $0x18] sm:$0xf]
  %v51 = vld [vmem:[%s1 + $0x1c] sm:$0xf]
  %v52 = vld [vmem:[%s1 + $0x20] sm:$0xf]
  %v53 = vld [vmem:[%s1 + $0x24] sm:$0xf]
  %v54 = vld [vmem:[%s1 + $0x28] sm:$0xf]
  %v55 = vld [vmem:[%s1 + $0x2c] sm:$0xf]
  %v56 = vld [vmem:[%s1 + $0x30] sm:$0xf]
  %v57 = vld [vmem:[%s1 + $0x34] sm:$0xf]
  %v58 = vld [vmem:[%s1 + $0x38] sm:$0xf]
  %v59 = vld [vmem:[%s1 + $0x3c] sm:$0xf]
  %v60 = vld [vmem:[%s1 + $0x40] sm:$0xf]
  %v61 = vld [vmem:[%s1 + $0x44] sm:$0xf]
  %v62 = vld [vmem:[%s1 + $0x48] sm:$0xf]
  %v63 = vld [vmem:[%s1 + $0x4c] sm:$0xf]
  %v64 = vld [vmem:[%s1 + $0x50] sm:$0xf]
  %v65 = vld [vmem:[%s1 + $0x54] sm:$0xf]
  %v66 = vld [vmem:[%s1 + $0x58] sm:$0xf]
  %v67 = vld [vmem:[%s1 + $0x5c] sm:$0xf]
  %v68 = vld [vmem:[%s1 + $0x60] sm:$0xf]
  %v69 = vld [vmem:[%s1 + $0x64] sm:$0xf]
  %v70 = vld [vmem:[%s1 + $0x68] sm:$0xf]
  %v71 = vld [vmem:[%s1 + $0x6c] sm:$0xf]
  %v72 = vld [vmem:[%s1 + $0x70] sm:$0xf]
  %v73 = vld [vmem:[%s1 + $0x74] sm:$0xf]
  %v74 = vld [vmem:[%s1 + $0x78] sm:$0xf]
  %v75 = vld [vmem:[%s1 + $0x7c] sm:$0xf]
  %v76 = vld [vmem:[%s1 + $0x80] sm:$0xf]
  %v77 = vld [vmem:[%s1 + $0x84] sm:$0xf]
  %v78 = vld [vmem:[%s1 + $0x88] sm:$0xf]
  %v79 = vld [vmem:[%s1 + $0x8c] sm:$0xf]
  %v80 = vld [vmem:[%s1 + $0x90] sm:$0xf]
  %v81 = vld [vmem:[%s1 + $0x94] sm:$0xf]
  %v82 = vld [vmem:[%s1 + $0x98] sm:$0xf]
  %v83 = vld [vmem:[%s1 + $0x9c] sm:$0xf]
  %v84 = vld [vmem:[%s1 + $0xa0] sm:$0xf]
  %v85 = vld [vmem:[%s1 + $0xa4] sm:$0xf]
  %v86 = vld [vmem:[%s1 + $0xa8] sm:$0xf]
  %v87 = vld [vmem:[%s1 + $0xac] sm:$0xf]
  %v88 = vld [vmem:[%s1 + $0xb0] sm:$0xf]
  %v89 = vld [vmem:[%s1 + $0xb4] sm:$0xf]
  %v90 = vld [vmem:[%s1 + $0xb8] sm:$0xf]
  %v91 = vld [vmem:[%s1 + $0xbc] sm:$0xf]
  %v92 = vld [vmem:[%s1 + $0xc0] sm:$0xf]
  %v93 = vld [vmem:[%s1 + $0xc4] sm:$0xf]
  %v94 = vld [vmem:[%s1 + $0xc8] sm:$0xf]
  %v95 = vld [vmem:[%s1 + $0xcc] sm:$0xf]
  %v96 = vld [vmem:[%s1 + $0xd0] sm:$0xf]
  %v97 = vld [vmem:[%s1 + $0xd4] sm:$0xf]
  %v98 = vld [vmem:[%s1 + $0xd8] sm:$0xf]
  %v99 = vld [vmem:[%s1 + $0xdc] sm:$0xf]
  %v100 = vld [vmem:[%s1 + $0xe0] sm:$0xf]
  %v101 = vld [vmem:[%s1 + $0xe4] sm:$0xf]
  %v102 = vld [vmem:[%s1 + $0xe8] sm:$0xf]
  %v103 = vld [vmem:[%s1 + $0xec] sm:$0xf]
  %v104 = vld [vmem:[%s1 + $0xf0] sm:$0xf]
  %v105 = vld [vmem:[%s1 + $0xf4] sm:$0xf]
  %v106 = vld [vmem:[%s1 + $0xf8] sm:$0xf]
  %v107 = vld [vmem:[%s1 + $0xfc] sm:$0xf]
  %v108 = vld [vmem:[%s1 + $0x100] sm:$0xf]
  %v109 = vld [vmem:[%s1 + $0x104] sm:$0xf]
  %v110 = vld [vmem:[%s1 + $0x108] sm:$0xf]
  %v111 = vld [vmem:[%s1 + $0x10c] sm:$0xf]
  %v112 = vld [vmem:[%s1 + $0x110] sm:$0xf]
  %v113 = vld [vmem:[%s1 + $0x114] sm:$0xf]
  %v114 = vld [vmem:[%s1 + $0x118] sm:$0xf]
  %v115 = vld [vmem:[%s1 + $0x11c] sm:$0xf]
  %v116 = vld [vmem:[%s1 + $0x120] sm:$0xf]
  %v117 = vld [vmem:[%s1 + $0x124] sm:$0xf]
  %v118 = vld [vmem:[%s1 + $0x128] sm:$0xf]
  %v119 = vld [vmem:[%s1 + $0x12c] sm:$0xf]
  %v120 = vld [vmem:[%s1 + $0x130] sm:$0xf]
  %v121 = vld [vmem:[%s1 + $0x134] sm:$0xf]
  %v122 = vld [vmem:[%s1 + $0x138] sm:$0xf]
  %v123 = vld [vmem:[%s1 + $0x13c] sm:$0xf]
  %v125 = vlaneseq
  %v126 = vshrl.u32 %v125, 7
  %v127 = vsub.s32 0, %v126
  %v128 = vrot.slane %v21, %v127
  %v210 = vunpack.c.l.b16 %v44
  %v211 = vunpack.c.l.b16 %v45
  %v212 = vunpack.c.l.b16 %v46
  %v213 = vunpack.c.l.b16 %v47
  %v214 = vunpack.c.l.b16 %v48
  %v215 = vunpack.c.l.b16 %v49
  %v216 = vunpack.c.l.b16 %v50
  %v217 = vunpack.c.l.b16 %v51
  %v218 = vunpack.c.l.b16 %v52
  %v219 = vunpack.c.l.b16 %v53
  %v220 = vunpack.c.l.b16 %v54
  %v221 = vunpack.c.l.b16 %v55
  %v222 = vunpack.c.l.b16 %v56
  %v223 = vunpack.c.l.b16 %v57
  %v224 = vunpack.c.l.b16 %v58
  %v225 = vunpack.c.l.b16 %v59
  %v226 = vunpack.c.l.b16 %v60
  %v227 = vunpack.c.l.b16 %v61
  %v228 = vunpack.c.l.b16 %v62
  %v229 = vunpack.c.l.b16 %v63
  %v230 = vunpack.c.l.b16 %v64
  %v231 = vunpack.c.l.b16 %v65
  %v232 = vunpack.c.l.b16 %v66
  %v233 = vunpack.c.l.b16 %v67
  %v234 = vunpack.c.l.b16 %v68
  %v235 = vunpack.c.l.b16 %v69
  %v236 = vunpack.c.l.b16 %v70
  %v237 = vunpack.c.l.b16 %v71
  %v238 = vunpack.c.l.b16 %v72
  %v239 = vunpack.c.l.b16 %v73
  %v240 = vunpack.c.l.b16 %v74
  %v241 = vunpack.c.l.b16 %v75
  %v242 = vunpack.c.l.b16 %v76
  %v243 = vunpack.c.l.b16 %v77
  %v244 = vunpack.c.l.b16 %v78
  %v245 = vunpack.c.l.b16 %v79
  %v246 = vunpack.c.l.b16 %v80
  %v247 = vunpack.c.l.b16 %v81
  %v248 = vunpack.c.l.b16 %v82
  %v249 = vunpack.c.l.b16 %v83
  %v250 = vunpack.c.l.b16 %v84
  %v251 = vunpack.c.l.b16 %v85
  %v252 = vunpack.c.l.b16 %v86
  %v253 = vunpack.c.l.b16 %v87
  %v254 = vunpack.c.l.b16 %v88
  %v255 = vunpack.c.l.b16 %v89
  %v256 = vunpack.c.l.b16 %v90
  %v257 = vunpack.c.l.b16 %v91
  %v258 = vunpack.c.l.b16 %v92
  %v259 = vunpack.c.l.b16 %v93
  %v260 = vunpack.c.l.b16 %v94
  %v261 = vunpack.c.l.b16 %v95
  %v262 = vunpack.c.l.b16 %v96
  %v263 = vunpack.c.l.b16 %v97
  %v264 = vunpack.c.l.b16 %v98
  %v265 = vunpack.c.l.b16 %v99
  %v266 = vunpack.c.l.b16 %v100
  %v267 = vunpack.c.l.b16 %v101
  %v268 = vunpack.c.l.b16 %v102
  %v269 = vunpack.c.l.b16 %v103
  %v270 = vunpack.c.l.b16 %v104
  %v271 = vunpack.c.l.b16 %v105
  %v272 = vunpack.c.l.b16 %v106
  %v273 = vunpack.c.l.b16 %v107
  %v274 = vunpack.c.l.b16 %v108
  %v275 = vunpack.c.l.b16 %v109
  %v276 = vunpack.c.l.b16 %v110
  %v277 = vunpack.c.l.b16 %v111
  %v278 = vunpack.c.l.b16 %v112
  %v279 = vunpack.c.l.b16 %v113
  %v280 = vunpack.c.l.b16 %v114
  %v281 = vunpack.c.l.b16 %v115
  %v282 = vunpack.c.l.b16 %v116
  %v283 = vunpack.c.l.b16 %v117
  %v284 = vunpack.c.l.b16 %v118
  %v285 = vunpack.c.l.b16 %v119
  %v286 = vunpack.c.l.b16 %v120
  %v287 = vunpack.c.l.b16 %v121
  %v288 = vunpack.c.l.b16 %v122
  %v289 = vunpack.c.l.b16 %v123
  %v290 = vpack.c.b16 %v211, %v210
  %v291 = vpack.c.b16 %v213, %v212
  %v292 = vpack.c.b16 %v215, %v214
  %v293 = vpack.c.b16 %v217, %v216
  %v294 = vpack.c.b16 %v219, %v218
  %v295 = vpack.c.b16 %v221, %v220
  %v296 = vpack.c.b16 %v223, %v222
  %v297 = vpack.c.b16 %v225, %v224
  %v298 = vpack.c.b16 %v227, %v226
  %v299 = vpack.c.b16 %v229, %v228
  %v300 = vpack.c.b16 %v231, %v230
  %v301 = vpack.c.b16 %v233, %v232
  %v302 = vpack.c.b16 %v235, %v234
  %v303 = vpack.c.b16 %v237, %v236
  %v304 = vpack.c.b16 %v239, %v238
  %v305 = vpack.c.b16 %v241, %v240
  %v306 = vpack.c.b16 %v243, %v242
  %v307 = vpack.c.b16 %v245, %v244
  %v308 = vpack.c.b16 %v247, %v246
  %v309 = vpack.c.b16 %v249, %v248
  %v310 = vpack.c.b16 %v251, %v250
  %v311 = vpack.c.b16 %v253, %v252
  %v312 = vpack.c.b16 %v255, %v254
  %v313 = vpack.c.b16 %v257, %v256
  %v314 = vpack.c.b16 %v259, %v258
  %v315 = vpack.c.b16 %v261, %v260
  %v316 = vpack.c.b16 %v263, %v262
  %v317 = vpack.c.b16 %v265, %v264
  %v318 = vpack.c.b16 %v267, %v266
  %v319 = vpack.c.b16 %v269, %v268
  %v320 = vpack.c.b16 %v271, %v270
  %v321 = vpack.c.b16 %v273, %v272
  %v322 = vpack.c.b16 %v275, %v274
  %v323 = vpack.c.b16 %v277, %v276
  %v324 = vpack.c.b16 %v279, %v278
  %v325 = vpack.c.b16 %v281, %v280
  %v326 = vpack.c.b16 %v283, %v282
  %v327 = vpack.c.b16 %v285, %v284
  %v328 = vpack.c.b16 %v287, %v286
  %v329 = vpack.c.b16 %v289, %v288
  %370 = vmatprep.subr.bf16.mxu0 0
  %371 = vmatpush1.bf16.msra.mxu0 %v290
  %372 = vmatprep.subr.bf16.mxu0 0
  %373 = vmatpush1.bf16.msra.mxu0 %v291
  %374 = vmatprep.subr.bf16.mxu0 0
  %375 = vmatpush1.bf16.msra.mxu0 %v292
  %376 = vmatprep.subr.bf16.mxu0 0
  %377 = vmatpush1.bf16.msra.mxu0 %v293
  %378 = vmatprep.subr.bf16.mxu0 0
  %379 = vmatpush1.bf16.msra.mxu0 %v294
  %380 = vmatprep.subr.bf16.mxu0 0
  %381 = vmatpush1.bf16.msra.mxu0 %v295
  %382 = vmatprep.subr.bf16.mxu0 0
  %383 = vmatpush1.bf16.msra.mxu0 %v296
  %384 = vmatprep.subr.bf16.mxu0 0
  %385 = vmatpush1.bf16.msra.mxu0 %v297
  %386 = vmatprep.subr.bf16.mxu0 0
  %387 = vmatpush1.bf16.msra.mxu0 %v298
  %388 = vmatprep.subr.bf16.mxu0 0
  %389 = vmatpush1.bf16.msra.mxu0 %v299
  %390 = vmatprep.subr.bf16.mxu0 0
  %391 = vmatpush1.bf16.msra.mxu0 %v300
  %392 = vmatprep.subr.bf16.mxu0 0
  %393 = vmatpush1.bf16.msra.mxu0 %v301
  %394 = vmatprep.subr.bf16.mxu0 0
  %395 = vmatpush1.bf16.msra.mxu0 %v302
  %396 = vmatprep.subr.bf16.mxu0 0
  %397 = vmatpush1.bf16.msra.mxu0 %v303
  %398 = vmatprep.subr.bf16.mxu0 0
  %399 = vmatpush1.bf16.msra.mxu0 %v304
  %400 = vmatprep.subr.bf16.mxu0 0
  %401 = vmatpush1.bf16.msra.mxu0 %v305
  %402 = vmatprep.mubr.bf16.mxu0 %v40
  %403 = vmatmul.mubr.bf16.gmra.mrb[0].mxu0 %v39
  %v404 = vpop.f32.mrb[0].mxu0
  %v405 = vadd.f32 %v128, %v404
  %v406 = vpop.f32.mrb[0].mxu0
  %v407 = vpop.f32.mrb[0].mxu0
  %v408 = vadd.f32 %v128, %v407
  %v409 = vpop.f32.mrb[0].mxu0
  %410 = vdwg.mxu0
  %411 = vmatprep.subr.bf16.mxu0 0
  %412 = vmatpush1.bf16.msra.mxu0 %v306
  %413 = vmatprep.subr.bf16.mxu0 0
  %414 = vmatpush1.bf16.msra.mxu0 %v307
  %415 = vmatprep.subr.bf16.mxu0 0
  %416 = vmatpush1.bf16.msra.mxu0 %v308
  %417 = vmatprep.subr.bf16.mxu0 0
  %418 = vmatpush1.bf16.msra.mxu0 %v309
  %419 = vmatprep.subr.bf16.mxu0 0
  %420 = vmatpush1.bf16.msra.mxu0 %v310
  %421 = vmatprep.subr.bf16.mxu0 0
  %422 = vmatpush1.bf16.msra.mxu0 %v311
  %423 = vmatprep.subr.bf16.mxu0 0
  %424 = vmatpush1.bf16.msra.mxu0 %v312
  %425 = vmatprep.subr.bf16.mxu0 0
  %426 = vmatpush1.bf16.msra.mxu0 %v313
  %427 = vmatprep.subr.bf16.mxu0 0
  %428 = vmatpush1.bf16.msra.mxu0 %v314
  %429 = vmatprep.subr.bf16.mxu0 0
  %430 = vmatpush1.bf16.msra.mxu0 %v315
  %431 = vmatprep.subr.bf16.mxu0 0
  %432 = vmatpush1.bf16.msra.mxu0 %v316
  %433 = vmatprep.subr.bf16.mxu0 0
  %434 = vmatpush1.bf16.msra.mxu0 %v317
  %435 = vmatprep.subr.bf16.mxu0 0
  %436 = vmatpush1.bf16.msra.mxu0 %v318
  %437 = vmatprep.subr.bf16.mxu0 0
  %438 = vmatpush1.bf16.msra.mxu0 %v319
  %439 = vmatprep.subr.bf16.mxu0 0
  %440 = vmatpush1.bf16.msra.mxu0 %v320
  %441 = vmatprep.subr.bf16.mxu0 0
  %442 = vmatpush1.bf16.msra.mxu0 %v321
  %443 = vmatprep.mubr.bf16.mxu0 %v42
  %444 = vmatmul.mubr.bf16.gmra.mrb[0].mxu0 %v41
  %v445 = vpop.f32.mrb[0].mxu0
  %v446 = vadd.f32 %v405, %v445
  %v447 = vpop.f32.mrb[0].mxu0
  %v448 = vpop.f32.mrb[0].mxu0
  %v449 = vadd.f32 %v408, %v448
  %v450 = vpop.f32.mrb[0].mxu0
  %451 = vdwg.mxu0
  %452 = vmatprep.subr.bf16.mxu0 0
  %453 = vmatpush1.bf16.msra.mxu0 %v322
  %454 = vmatprep.subr.bf16.mxu0 0
  %455 = vmatpush1.bf16.msra.mxu0 %v323
  %456 = vmatprep.subr.bf16.mxu0 0
  %457 = vmatpush1.bf16.msra.mxu0 %v324
  %458 = vmatprep.subr.bf16.mxu0 0
  %459 = vmatpush1.bf16.msra.mxu0 %v325
  %460 = vmatprep.subr.bf16.mxu0 0
  %461 = vmatpush1.bf16.msra.mxu0 %v326
  %462 = vmatprep.subr.bf16.mxu0 0
  %463 = vmatpush1.bf16.msra.mxu0 %v327
  %464 = vmatprep.subr.bf16.mxu0 0
  %465 = vmatpush1.bf16.msra.mxu0 %v328
  %466 = vmatprep.subr.bf16.mxu0 0
  %467 = vmatpush1.bf16.msra.mxu0 %v329
  %468 = vmatprep.subr.bf16.mxu0 0
  %469 = vmatpush1.bf16.msra.mxu0 0
  %470 = vmatprep.subr.bf16.mxu0 0
  %471 = vmatpush1.bf16.msra.mxu0 0
  %472 = vmatprep.subr.bf16.mxu0 0
  %473 = vmatpush1.bf16.msra.mxu0 0
  %474 = vmatprep.subr.bf16.mxu0 0
  %475 = vmatpush1.bf16.msra.mxu0 0
  %476 = vmatprep.subr.bf16.mxu0 0
  %477 = vmatpush1.bf16.msra.mxu0 0
  %478 = vmatprep.subr.bf16.mxu0 0
  %479 = vmatpush1.bf16.msra.mxu0 0
  %480 = vmatprep.subr.bf16.mxu0 0
  %481 = vmatpush1.bf16.msra.mxu0 0
  %482 = vmatprep.subr.bf16.mxu0 0
  %483 = vmatpush1.bf16.msra.mxu0 0
  %484 = vmatprep.mubr.bf16.mxu0 0
  %485 = vmatmul.mubr.bf16.gmra.mrb[0].mxu0 %v43
  %v486 = vpop.f32.mrb[0].mxu0
  %v487 = vadd.f32 %v446, %v486
  %v488 = vpop.f32.mrb[0].mxu0
  %v489 = vpop.f32.mrb[0].mxu0
  %v490 = vadd.f32 %v449, %v489
  %v491 = vpop.f32.mrb[0].mxu0
  %492 = vdwg.mxu0
  %v493 = vmax.f32 %v487, 0.0
  %v494 = vmax.f32 %v490, 0.0
  %495 = vst [vmem:[#allocation2 + $0x2] sm:$0xff] %v493
  %496 = vst [vmem:[#allocation2 + $0xa] sm:$0xff] %v494
  %v497 = vld [vmem:[#allocation2] sm:$0xff]
  %v498 = vld [vmem:[#allocation2 + $0x8] sm:$0xff]
  %v499 = vld [vmem:[#allocation2 + $0x1] sm:$0xff]
  %v500 = vld [vmem:[#allocation2 + $0x9] sm:$0xff]
  %v501 = vld [vmem:[#allocation2 + $0x2] sm:$0xff]
  %v502 = vld [vmem:[#allocation2 + $0xa] sm:$0xff]
  %v503 = vld [vmem:[#allocation2 + $0x3] sm:$0xff]
  %v504 = vld [vmem:[#allocation2 + $0xb] sm:$0xff]
  %v505 = vld [vmem:[#allocation2 + $0x4] sm:$0xff]
  %v506 = vld [vmem:[#allocation2 + $0xc] sm:$0xff]
  %v507 = vpack.c.bf16 %v498, %v497
  %v508 = vpack.c.bf16 %v500, %v499
  %v509 = vpack.c.bf16 %v502, %v501
  %v510 = vpack.c.bf16 %v504, %v503
  %v511 = vpack.c.bf16 %v506, %v505
  %v512 = vld [vmem:[%s3] sm:$0xf]
  %v513 = vld [vmem:[%s3 + $0x4] sm:$0xf]
  %v514 = vld [vmem:[%s3 + $0x8] sm:$0xf]
  %v515 = vld [vmem:[%s3 + $0xc] sm:$0xf]
  %v516 = vld [vmem:[%s3 + $0x10] sm:$0xf]
  %v517 = vld [vmem:[%s3 + $0x14] sm:$0xf]
  %v518 = vld [vmem:[%s3 + $0x18] sm:$0xf]
  %v519 = vld [vmem:[%s3 + $0x1c] sm:$0xf]
  %v520 = vld [vmem:[%s3 + $0x20] sm:$0xf]
  %v521 = vld [vmem:[%s3 + $0x24] sm:$0xf]
  %v522 = vld [vmem:[%s3 + $0x28] sm:$0xf]
  %v523 = vld [vmem:[%s3 + $0x2c] sm:$0xf]
  %v524 = vld [vmem:[%s3 + $0x30] sm:$0xf]
  %v525 = vld [vmem:[%s3 + $0x34] sm:$0xf]
  %v526 = vld [vmem:[%s3 + $0x38] sm:$0xf]
  %v527 = vld [vmem:[%s3 + $0x3c] sm:$0xf]
  %v528 = vld [vmem:[%s3 + $0x40] sm:$0xf]
  %v529 = vld [vmem:[%s3 + $0x44] sm:$0xf]
  %v530 = vld [vmem:[%s3 + $0x48] sm:$0xf]
  %v531 = vld [vmem:[%s3 + $0x4c] sm:$0xf]
  %v532 = vld [vmem:[%s3 + $0x50] sm:$0xf]
  %v533 = vld [vmem:[%s3 + $0x54] sm:$0xf]
  %v534 = vld [vmem:[%s3 + $0x58] sm:$0xf]
  %v535 = vld [vmem:[%s3 + $0x5c] sm:$0xf]
  %v536 = vld [vmem:[%s3 + $0x60] sm:$0xf]
  %v537 = vld [vmem:[%s3 + $0x64] sm:$0xf]
  %v538 = vld [vmem:[%s3 + $0x68] sm:$0xf]
  %v539 = vld [vmem:[%s3 + $0x6c] sm:$0xf]
  %v540 = vld [vmem:[%s3 + $0x70] sm:$0xf]
  %v541 = vld [vmem:[%s3 + $0x74] sm:$0xf]
  %v542 = vld [vmem:[%s3 + $0x78] sm:$0xf]
  %v543 = vld [vmem:[%s3 + $0x7c] sm:$0xf]
  %v544 = vld [vmem:[%s3 + $0x80] sm:$0xf]
  %v545 = vld [vmem:[%s3 + $0x84] sm:$0xf]
  %v546 = vld [vmem:[%s3 + $0x88] sm:$0xf]
  %v547 = vld [vmem:[%s3 + $0x8c] sm:$0xf]
  %v548 = vld [vmem:[%s3 + $0x90] sm:$0xf]
  %v549 = vld [vmem:[%s3 + $0x94] sm:$0xf]
  %v550 = vld [vmem:[%s3 + $0x98] sm:$0xf]
  %v551 = vld [vmem:[%s3 + $0x9c] sm:$0xf]
  %v552 = vld [vmem:[%s3 + $0xa0] sm:$0xf]
  %v553 = vld [vmem:[%s3 + $0xa4] sm:$0xf]
  %v554 = vld [vmem:[%s3 + $0xa8] sm:$0xf]
  %v555 = vld [vmem:[%s3 + $0xac] sm:$0xf]
  %v556 = vld [vmem:[%s3 + $0xb0] sm:$0xf]
  %v557 = vld [vmem:[%s3 + $0xb4] sm:$0xf]
  %v558 = vld [vmem:[%s3 + $0xb8] sm:$0xf]
  %v559 = vld [vmem:[%s3 + $0xbc] sm:$0xf]
  %v560 = vld [vmem:[%s3 + $0xc0] sm:$0xf]
  %v561 = vld [vmem:[%s3 + $0xc4] sm:$0xf]
  %v562 = vld [vmem:[%s3 + $0xc8] sm:$0xf]
  %v563 = vld [vmem:[%s3 + $0xcc] sm:$0xf]
  %v564 = vld [vmem:[%s3 + $0xd0] sm:$0xf]
  %v565 = vld [vmem:[%s3 + $0xd4] sm:$0xf]
  %v566 = vld [vmem:[%s3 + $0xd8] sm:$0xf]
  %v567 = vld [vmem:[%s3 + $0xdc] sm:$0xf]
  %v568 = vld [vmem:[%s3 + $0xe0] sm:$0xf]
  %v569 = vld [vmem:[%s3 + $0xe4] sm:$0xf]
  %v570 = vld [vmem:[%s3 + $0xe8] sm:$0xf]
  %v571 = vld [vmem:[%s3 + $0xec] sm:$0xf]
  %v572 = vld [vmem:[%s3 + $0xf0] sm:$0xf]
  %v573 = vld [vmem:[%s3 + $0xf4] sm:$0xf]
  %v574 = vld [vmem:[%s3 + $0xf8] sm:$0xf]
  %v575 = vld [vmem:[%s3 + $0xfc] sm:$0xf]
  %v576 = vld [vmem:[%s3 + $0x100] sm:$0xf]
  %v577 = vld [vmem:[%s3 + $0x104] sm:$0xf]
  %v578 = vld [vmem:[%s3 + $0x108] sm:$0xf]
  %v579 = vld [vmem:[%s3 + $0x10c] sm:$0xf]
  %v580 = vld [vmem:[%s3 + $0x110] sm:$0xf]
  %v581 = vld [vmem:[%s3 + $0x114] sm:$0xf]
  %v582 = vld [vmem:[%s3 + $0x118] sm:$0xf]
  %v583 = vld [vmem:[%s3 + $0x11c] sm:$0xf]
  %v584 = vld [vmem:[%s3 + $0x120] sm:$0xf]
  %v585 = vld [vmem:[%s3 + $0x124] sm:$0xf]
  %v586 = vld [vmem:[%s3 + $0x128] sm:$0xf]
  %v587 = vld [vmem:[%s3 + $0x12c] sm:$0xf]
  %v588 = vld [vmem:[%s3 + $0x130] sm:$0xf]
  %v589 = vld [vmem:[%s3 + $0x134] sm:$0xf]
  %v590 = vld [vmem:[%s3 + $0x138] sm:$0xf]
  %v591 = vld [vmem:[%s3 + $0x13c] sm:$0xf]
  %v593 = vlaneseq
  %v594 = vshrl.u32 %v593, 7
  %v595 = vsub.s32 0, %v594
  %v596 = vrot.slane %v22, %v595
  %v678 = vunpack.c.l.b16 %v512
  %v679 = vunpack.c.l.b16 %v513
  %v680 = vunpack.c.l.b16 %v514
  %v681 = vunpack.c.l.b16 %v515
  %v682 = vunpack.c.l.b16 %v516
  %v683 = vunpack.c.l.b16 %v517
  %v684 = vunpack.c.l.b16 %v518
  %v685 = vunpack.c.l.b16 %v519
  %v686 = vunpack.c.l.b16 %v520
  %v687 = vunpack.c.l.b16 %v521
  %v688 = vunpack.c.l.b16 %v522
  %v689 = vunpack.c.l.b16 %v523
  %v690 = vunpack.c.l.b16 %v524
  %v691 = vunpack.c.l.b16 %v525
  %v692 = vunpack.c.l.b16 %v526
  %v693 = vunpack.c.l.b16 %v527
  %v694 = vunpack.c.l.b16 %v528
  %v695 = vunpack.c.l.b16 %v529
  %v696 = vunpack.c.l.b16 %v530
  %v697 = vunpack.c.l.b16 %v531
  %v698 = vunpack.c.l.b16 %v532
  %v699 = vunpack.c.l.b16 %v533
  %v700 = vunpack.c.l.b16 %v534
  %v701 = vunpack.c.l.b16 %v535
  %v702 = vunpack.c.l.b16 %v536
  %v703 = vunpack.c.l.b16 %v537
  %v704 = vunpack.c.l.b16 %v538
  %v705 = vunpack.c.l.b16 %v539
  %v706 = vunpack.c.l.b16 %v540
  %v707 = vunpack.c.l.b16 %v541
  %v708 = vunpack.c.l.b16 %v542
  %v709 = vunpack.c.l.b16 %v543
  %v710 = vunpack.c.l.b16 %v544
  %v711 = vunpack.c.l.b16 %v545
  %v712 = vunpack.c.l.b16 %v546
  %v713 = vunpack.c.l.b16 %v547
  %v714 = vunpack.c.l.b16 %v548
  %v715 = vunpack.c.l.b16 %v549
  %v716 = vunpack.c.l.b16 %v550
  %v717 = vunpack.c.l.b16 %v551
  %v718 = vunpack.c.l.b16 %v552
  %v719 = vunpack.c.l.b16 %v553
  %v720 = vunpack.c.l.b16 %v554
  %v721 = vunpack.c.l.b16 %v555
  %v722 = vunpack.c.l.b16 %v556
  %v723 = vunpack.c.l.b16 %v557
  %v724 = vunpack.c.l.b16 %v558
  %v725 = vunpack.c.l.b16 %v559
  %v726 = vunpack.c.l.b16 %v560
  %v727 = vunpack.c.l.b16 %v561
  %v728 = vunpack.c.l.b16 %v562
  %v729 = vunpack.c.l.b16 %v563
  %v730 = vunpack.c.l.b16 %v564
  %v731 = vunpack.c.l.b16 %v565
  %v732 = vunpack.c.l.b16 %v566
  %v733 = vunpack.c.l.b16 %v567
  %v734 = vunpack.c.l.b16 %v568
  %v735 = vunpack.c.l.b16 %v569
  %v736 = vunpack.c.l.b16 %v570
  %v737 = vunpack.c.l.b16 %v571
  %v738 = vunpack.c.l.b16 %v572
  %v739 = vunpack.c.l.b16 %v573
  %v740 = vunpack.c.l.b16 %v574
  %v741 = vunpack.c.l.b16 %v575
  %v742 = vunpack.c.l.b16 %v576
  %v743 = vunpack.c.l.b16 %v577
  %v744 = vunpack.c.l.b16 %v578
  %v745 = vunpack.c.l.b16 %v579
  %v746 = vunpack.c.l.b16 %v580
  %v747 = vunpack.c.l.b16 %v581
  %v748 = vunpack.c.l.b16 %v582
  %v749 = vunpack.c.l.b16 %v583
  %v750 = vunpack.c.l.b16 %v584
  %v751 = vunpack.c.l.b16 %v585
  %v752 = vunpack.c.l.b16 %v586
  %v753 = vunpack.c.l.b16 %v587
  %v754 = vunpack.c.l.b16 %v588
  %v755 = vunpack.c.l.b16 %v589
  %v756 = vunpack.c.l.b16 %v590
  %v757 = vunpack.c.l.b16 %v591
  %v758 = vpack.c.b16 %v679, %v678
  %v759 = vpack.c.b16 %v681, %v680
  %v760 = vpack.c.b16 %v683, %v682
  %v761 = vpack.c.b16 %v685, %v684
  %v762 = vpack.c.b16 %v687, %v686
  %v763 = vpack.c.b16 %v689, %v688
  %v764 = vpack.c.b16 %v691, %v690
  %v765 = vpack.c.b16 %v693, %v692
  %v766 = vpack.c.b16 %v695, %v694
  %v767 = vpack.c.b16 %v697, %v696
  %v768 = vpack.c.b16 %v699, %v698
  %v769 = vpack.c.b16 %v701, %v700
  %v770 = vpack.c.b16 %v703, %v702
  %v771 = vpack.c.b16 %v705, %v704
  %v772 = vpack.c.b16 %v707, %v706
  %v773 = vpack.c.b16 %v709, %v708
  %v774 = vpack.c.b16 %v711, %v710
  %v775 = vpack.c.b16 %v713, %v712
  %v776 = vpack.c.b16 %v715, %v714
  %v777 = vpack.c.b16 %v717, %v716
  %v778 = vpack.c.b16 %v719, %v718
  %v779 = vpack.c.b16 %v721, %v720
  %v780 = vpack.c.b16 %v723, %v722
  %v781 = vpack.c.b16 %v725, %v724
  %v782 = vpack.c.b16 %v727, %v726
  %v783 = vpack.c.b16 %v729, %v728
  %v784 = vpack.c.b16 %v731, %v730
  %v785 = vpack.c.b16 %v733, %v732
  %v786 = vpack.c.b16 %v735, %v734
  %v787 = vpack.c.b16 %v737, %v736
  %v788 = vpack.c.b16 %v739, %v738
  %v789 = vpack.c.b16 %v741, %v740
  %v790 = vpack.c.b16 %v743, %v742
  %v791 = vpack.c.b16 %v745, %v744
  %v792 = vpack.c.b16 %v747, %v746
  %v793 = vpack.c.b16 %v749, %v748
  %v794 = vpack.c.b16 %v751, %v750
  %v795 = vpack.c.b16 %v753, %v752
  %v796 = vpack.c.b16 %v755, %v754
  %v797 = vpack.c.b16 %v757, %v756
  %838 = vmatprep.subr.bf16.mxu0 0
  %839 = vmatpush1.bf16.msra.mxu0 %v758
  %840 = vmatprep.subr.bf16.mxu0 0
  %841 = vmatpush1.bf16.msra.mxu0 %v759
  %842 = vmatprep.subr.bf16.mxu0 0
  %843 = vmatpush1.bf16.msra.mxu0 %v760
  %844 = vmatprep.subr.bf16.mxu0 0
  %845 = vmatpush1.bf16.msra.mxu0 %v761
  %846 = vmatprep.subr.bf16.mxu0 0
  %847 = vmatpush1.bf16.msra.mxu0 %v762
  %848 = vmatprep.subr.bf16.mxu0 0
  %849 = vmatpush1.bf16.msra.mxu0 %v763
  %850 = vmatprep.subr.bf16.mxu0 0
  %851 = vmatpush1.bf16.msra.mxu0 %v764
  %852 = vmatprep.subr.bf16.mxu0 0
  %853 = vmatpush1.bf16.msra.mxu0 %v765
  %854 = vmatprep.subr.bf16.mxu0 0
  %855 = vmatpush1.bf16.msra.mxu0 %v766
  %856 = vmatprep.subr.bf16.mxu0 0
  %857 = vmatpush1.bf16.msra.mxu0 %v767
  %858 = vmatprep.subr.bf16.mxu0 0
  %859 = vmatpush1.bf16.msra.mxu0 %v768
  %860 = vmatprep.subr.bf16.mxu0 0
  %861 = vmatpush1.bf16.msra.mxu0 %v769
  %862 = vmatprep.subr.bf16.mxu0 0
  %863 = vmatpush1.bf16.msra.mxu0 %v770
  %864 = vmatprep.subr.bf16.mxu0 0
  %865 = vmatpush1.bf16.msra.mxu0 %v771
  %866 = vmatprep.subr.bf16.mxu0 0
  %867 = vmatpush1.bf16.msra.mxu0 %v772
  %868 = vmatprep.subr.bf16.mxu0 0
  %869 = vmatpush1.bf16.msra.mxu0 %v773
  %870 = vmatprep.mubr.bf16.mxu0 %v508
  %871 = vmatmul.mubr.bf16.gmra.mrb[0].mxu0 %v507
  %v872 = vpop.f32.mrb[0].mxu0
  %v873 = vadd.f32 %v596, %v872
  %v874 = vpop.f32.mrb[0].mxu0
  %v875 = vpop.f32.mrb[0].mxu0
  %v876 = vadd.f32 %v596, %v875
  %v877 = vpop.f32.mrb[0].mxu0
  %878 = vdwg.mxu0
  %879 = vmatprep.subr.bf16.mxu0 0
  %880 = vmatpush1.bf16.msra.mxu0 %v774
  %881 = vmatprep.subr.bf16.mxu0 0
  %882 = vmatpush1.bf16.msra.mxu0 %v775
  %883 = vmatprep.subr.bf16.mxu0 0
  %884 = vmatpush1.bf16.msra.mxu0 %v776
  %885 = vmatprep.subr.bf16.mxu0 0
  %886 = vmatpush1.bf16.msra.mxu0 %v777
  %887 = vmatprep.subr.bf16.mxu0 0
  %888 = vmatpush1.bf16.msra.mxu0 %v778
  %889 = vmatprep.subr.bf16.mxu0 0
  %890 = vmatpush1.bf16.msra.mxu0 %v779
  %891 = vmatprep.subr.bf16.mxu0 0
  %892 = vmatpush1.bf16.msra.mxu0 %v780
  %893 = vmatprep.subr.bf16.mxu0 0
  %894 = vmatpush1.bf16.msra.mxu0 %v781
  %895 = vmatprep.subr.bf16.mxu0 0
  %896 = vmatpush1.bf16.msra.mxu0 %v782
  %897 = vmatprep.subr.bf16.mxu0 0
  %898 = vmatpush1.bf16.msra.mxu0 %v783
  %899 = vmatprep.subr.bf16.mxu0 0
  %900 = vmatpush1.bf16.msra.mxu0 %v784
  %901 = vmatprep.subr.bf16.mxu0 0
  %902 = vmatpush1.bf16.msra.mxu0 %v785
  %903 = vmatprep.subr.bf16.mxu0 0
  %904 = vmatpush1.bf16.msra.mxu0 %v786
  %905 = vmatprep.subr.bf16.mxu0 0
  %906 = vmatpush1.bf16.msra.mxu0 %v787
  %907 = vmatprep.subr.bf16.mxu0 0
  %908 = vmatpush1.bf16.msra.mxu0 %v788
  %909 = vmatprep.subr.bf16.mxu0 0
  %910 = vmatpush1.bf16.msra.mxu0 %v789
  %911 = vmatprep.mubr.bf16.mxu0 %v510
  %912 = vmatmul.mubr.bf16.gmra.mrb[0].mxu0 %v509
  %v913 = vpop.f32.mrb[0].mxu0
  %v914 = vadd.f32 %v873, %v913
  %v915 = vpop.f32.mrb[0].mxu0
  %v916 = vpop.f32.mrb[0].mxu0
  %v917 = vadd.f32 %v876, %v916
  %v918 = vpop.f32.mrb[0].mxu0
  %919 = vdwg.mxu0
  %920 = vmatprep.subr.bf16.mxu0 0
  %921 = vmatpush1.bf16.msra.mxu0 %v790
  %922 = vmatprep.subr.bf16.mxu0 0
  %923 = vmatpush1.bf16.msra.mxu0 %v791
  %924 = vmatprep.subr.bf16.mxu0 0
  %925 = vmatpush1.bf16.msra.mxu0 %v792
  %926 = vmatprep.subr.bf16.mxu0 0
  %927 = vmatpush1.bf16.msra.mxu0 %v793
  %928 = vmatprep.subr.bf16.mxu0 0
  %929 = vmatpush1.bf16.msra.mxu0 %v794
  %930 = vmatprep.subr.bf16.mxu0 0
  %931 = vmatpush1.bf16.msra.mxu0 %v795
  %932 = vmatprep.subr.bf16.mxu0 0
  %933 = vmatpush1.bf16.msra.mxu0 %v796
  %934 = vmatprep.subr.bf16.mxu0 0
  %935 = vmatpush1.bf16.msra.mxu0 %v797
  %936 = vmatprep.subr.bf16.mxu0 0
  %937 = vmatpush1.bf16.msra.mxu0 0
  %938 = vmatprep.subr.bf16.mxu0 0
  %939 = vmatpush1.bf16.msra.mxu0 0
  %940 = vmatprep.subr.bf16.mxu0 0
  %941 = vmatpush1.bf16.msra.mxu0 0
  %942 = vmatprep.subr.bf16.mxu0 0
  %943 = vmatpush1.bf16.msra.mxu0 0
  %944 = vmatprep.subr.bf16.mxu0 0
  %945 = vmatpush1.bf16.msra.mxu0 0
  %946 = vmatprep.subr.bf16.mxu0 0
  %947 = vmatpush1.bf16.msra.mxu0 0
  %948 = vmatprep.subr.bf16.mxu0 0
  %949 = vmatpush1.bf16.msra.mxu0 0
  %950 = vmatprep.subr.bf16.mxu0 0
  %951 = vmatpush1.bf16.msra.mxu0 0
  %952 = vmatprep.mubr.bf16.mxu0 0
  %953 = vmatmul.mubr.bf16.gmra.mrb[0].mxu0 %v511
  %v954 = vpop.f32.mrb[0].mxu0
  %v955 = vadd.f32 %v914, %v954
  %v956 = vpop.f32.mrb[0].mxu0
  %v957 = vpop.f32.mrb[0].mxu0
  %v958 = vadd.f32 %v917, %v957
  %v959 = vpop.f32.mrb[0].mxu0
  %960 = vdwg.mxu0
  %v961 = vadd.f32 %v955, %v25
  %v962 = vadd.f32 %v958, %v26
  %v963 = vmax.f32 %v961, 0.0
  %v964 = vmax.f32 %v962, 0.0
  %965 = vst [vmem:[#allocation2 + $0x2] sm:$0xff] %v963
  %966 = vst [vmem:[#allocation2 + $0xa] sm:$0xff] %v964
  %s967 = scalar_lea.vmem [#allocation2], 2
  %v968 = vld [vmem:[%s967] ss:$2 sm:$0x3f]
  %s969 = scalar_lea.vmem [#allocation2], 3
  %v970 = vld [vmem:[%s969] ss:$2 sm:$0x3f]
  %v971 = vmax.f32 %v968, %v970
  %s972 = scalar_lea.vmem [#allocation2], 4
  %v973 = vld [vmem:[%s972] ss:$2 sm:$0x3f]
  %v974 = vmax.f32 %v971, %v973
  %s975 = scalar_lea.vmem [#allocation2], 5
  %v976 = vld [vmem:[%s975] ss:$2 sm:$0x3f]
  %v977 = vmax.f32 %v974, %v976
  %s978 = scalar_lea.vmem [#allocation2], 6
  %v979 = vld [vmem:[%s978] ss:$2 sm:$0x3f]
  %v980 = vmax.f32 %v977, %v979
  %981 = vst [vmem:[%s5] sm:$0x3f] %v980
  // Predicated region
  $region22: #{resblock_forward.1} parent=0 // pred_check
    _
  $region23: #{resblock_forward.1} parent=0 // pred_check_branch
    %983 = sbr.rel (0) target = $region25
  $region24: #{resblock_forward.1} parent=0 // pred_region
    _
  $region25: #{resblock_forward.1} parent=0 // pred_fallthru
    _
  // Predicated region
  $region26: #{resblock_forward.1} parent=0 // pred_check
    _
  $region27: #{resblock_forward.1} parent=0 // pred_check_branch
    %985 = sbr.rel (0) target = $region29
  $region28: #{resblock_forward.1} parent=0 // pred_region
    _
  $region29: #{resblock_forward.1} parent=0 // pred_fallthru
    _

</llo_original>
